<compile_context>
chip_gen: v7x
topology: tpu7x:2x2x1
jax: 0.10.0
libtpu: 0.0.40
codegen_flags: <defaults>
</compile_context>

<pallas_src>
import functools

import jax
import jax.numpy as jnp
from jax.experimental import pallas as pl
from jax.experimental.pallas import tpu as pltpu

LANES = 128
SUBLANES = 8
SLAB_COLS = SUBLANES * LANES          # 1024-lane-wide output slab
MAX_TILE_ROWS = 256                   # 256 * 1024 * 4 B = 1 MiB per f32 tile


def _mix_exp_phi_kernel(nmix, params_ref, t_ref, o_ref):
    # params_ref: SMEM (2*nmix,): [softmax(mix)_0..nmix-1, -exp(slope)_0..nmix-1]
    # t_ref / o_ref: VMEM (tile_rows, SLAB_COLS) tiles
    t = t_ref[...].astype(jnp.float32)
    # Seed the accumulator with term 0; negation already folded into params.
    acc = params_ref[0] * jnp.exp(t * params_ref[nmix])
    for j in range(1, nmix):          # nmix is tiny and static -> unrolled
        acc = acc + params_ref[j] * jnp.exp(t * params_ref[nmix + j])
    o_ref[...] = acc.astype(o_ref.dtype)


def _choose_tile_rows(rows):
    """Pick a row-block size: ~1 MiB tiles, >=2 grid steps when possible."""
    if rows <= MAX_TILE_ROWS:
        if rows >= 2 * SUBLANES:
            # Split into at least two blocks (multiple of 8 rows) so the grid
            # axis can shard across v7x's two TensorCores.
            return max(SUBLANES, ((rows // 2) // SUBLANES) * SUBLANES)
        return rows                   # tiny slab: one full-extent block
    return MAX_TILE_ROWS


def mix_exp_phi(t, mix, slope):
    """JAX/Pallas equivalent of MixExpPhi.forward(t)."""
    s = t.shape
    io_dtype = t.dtype
    if not jnp.issubdtype(io_dtype, jnp.floating):
        io_dtype = jnp.float32
        t = t.astype(io_dtype)

    t_flat = t.reshape(-1)
    n = t_flat.shape[0]

    # Reshape to a lane-dense [rows, 1024] slab.  When n is already a multiple
    # of 1024 (e.g. the 2x4x16x16 example) this is a free metadata reshape —
    # no pad / copy pass.
    n_pad = ((n + SLAB_COLS - 1) // SLAB_COLS) * SLAB_COLS
    padded = n_pad != n
    if padded:
        # TODO(synk): push this <1024-element ragged tail into the kernel with
        # a masked store instead of a pad copy; only hit when n % 1024 != 0.
        t_flat = jnp.pad(t_flat, (0, n_pad - n))
    t2d = t_flat.reshape(-1, SLAB_COLS)
    rows = t2d.shape[0]

    tile_rows = _choose_tile_rows(rows)
    grid = pl.cdiv(rows, tile_rows)

    nmix = mix.shape[0]
    m = jax.nn.softmax(mix.astype(jnp.float32))
    neg_w = -jnp.exp(slope.astype(jnp.float32))
    params = jnp.concatenate([m, neg_w], axis=0)       # (2*nmix,) -> SMEM

    kernel = functools.partial(_mix_exp_phi_kernel, nmix)
    tile_spec = pl.BlockSpec((tile_rows, SLAB_COLS), lambda i: (i, 0))

    out2d = pl.pallas_call(
        kernel,
        out_shape=jax.ShapeDtypeStruct((rows, SLAB_COLS), io_dtype),
        grid_spec=pltpu.PrefetchScalarGridSpec(
            num_scalar_prefetch=0,
            grid=(grid,),
            in_specs=[
                pl.BlockSpec(memory_space=pltpu.MemorySpace.SMEM),  # params
                tile_spec,                                          # t tile
            ],
            out_specs=tile_spec,
        ),
        compiler_params=pltpu.CompilerParams(
            dimension_semantics=("parallel",)),
    )(params, t2d)

    out_flat = out2d.reshape(-1)
    if padded:
        out_flat = out_flat[:n]
    return out_flat.reshape(s)


def mix_exp_phi_ref(t, mix, slope):
    """Pure-JAX reference matching the PyTorch forward exactly."""
    s = t.shape
    t_ = t.reshape(-1).astype(jnp.float32)
    m = jax.nn.softmax(mix.astype(jnp.float32))
    w = jnp.exp(slope.astype(jnp.float32))
    exps = jnp.exp(-t_[:, None] * w[None, :])
    return jnp.sum(m * exps, axis=1).reshape(s).astype(t.dtype)


if __name__ == "__main__":
    # Deterministic parameter init, matching MixExpPhi.__init__ defaults:
    #   mix   = [log(0.2), log(0.8)]
    #   slope = log([10.0, 1e6])
    mix = jnp.log(jnp.array([0.2, 0.8], dtype=jnp.float32))
    slope = jnp.log(jnp.array([10.0, 1000000.0], dtype=jnp.float32))

    # Example input: small NCHW-like tensor of "times" in [0, 1).
    key = jax.random.PRNGKey(0)
    x = jax.random.uniform(key, (2, 4, 16, 16), dtype=jnp.float32)

    out = mix_exp_phi(x, mix, slope)
    out = jax.block_until_ready(out)

    ref = mix_exp_phi_ref(x, mix, slope)
    assert out.shape == x.shape
    assert jnp.allclose(out, ref, atol=1e-6, rtol=1e-6), "mismatch vs reference"

    print("KERNEL_OK")
</pallas_src>

<mosaic_0001>
module attributes {stable_mosaic.version = 11 : i64} {
  func.func @_mix_exp_phi_kernel(%arg0: i32, %arg1: memref<4xf32, #tpu.memory_space<smem>>, %arg2: memref<2x1024xf32, #tpu.memory_space<vmem>>, %arg3: memref<2x1024xf32, #tpu.memory_space<vmem>>) attributes {dimension_semantics = [#tpu.dimension_semantics<parallel>], iteration_bounds = array<i64: 1>, scalar_prefetch = 0 : i64, scratch_operands = 0 : i64, tpu.core_type = #tpu.core_type<tc>, window_params = [{transform_indices = @transform_0, window_bounds = array<i64: 4>}, {transform_indices = @transform_1, window_bounds = array<i64: 2, 1024>}, {transform_indices = @transform_2, window_bounds = array<i64: 2, 1024>}]} {
    %c0 = arith.constant 0 : index
    %c0_0 = arith.constant 0 : index
    %0 = vector.load %arg2[%c0, %c0_0] : memref<2x1024xf32, #tpu.memory_space<vmem>>, vector<2x1024xf32>
    %c0_1 = arith.constant 0 : index
    %1 = memref.load %arg1[%c0_1] : memref<4xf32, #tpu.memory_space<smem>>
    %c2 = arith.constant 2 : index
    %2 = memref.load %arg1[%c2] : memref<4xf32, #tpu.memory_space<smem>>
    %3 = vector.broadcast %2 : f32 to vector<2x1024xf32>
    %4 = arith.mulf %0, %3 : vector<2x1024xf32>
    %5 = math.exp %4 : vector<2x1024xf32>
    %6 = vector.broadcast %1 : f32 to vector<2x1024xf32>
    %7 = arith.mulf %6, %5 : vector<2x1024xf32>
    %c1 = arith.constant 1 : index
    %8 = memref.load %arg1[%c1] : memref<4xf32, #tpu.memory_space<smem>>
    %c3 = arith.constant 3 : index
    %9 = memref.load %arg1[%c3] : memref<4xf32, #tpu.memory_space<smem>>
    %10 = vector.broadcast %9 : f32 to vector<2x1024xf32>
    %11 = arith.mulf %0, %10 : vector<2x1024xf32>
    %12 = math.exp %11 : vector<2x1024xf32>
    %13 = vector.broadcast %8 : f32 to vector<2x1024xf32>
    %14 = arith.mulf %13, %12 : vector<2x1024xf32>
    %15 = arith.addf %7, %14 : vector<2x1024xf32>
    %c0_2 = arith.constant 0 : index
    %c0_3 = arith.constant 0 : index
    %16 = vector.load %arg3[%c0_2, %c0_3] : memref<2x1024xf32, #tpu.memory_space<vmem>>, vector<2x1024xf32>
    tpu.vector_store %arg3[%c0_2, %c0_3], %15 {strides = array<i32>} : memref<2x1024xf32, #tpu.memory_space<vmem>>, vector<2x1024xf32>,
    return
  }
  func.func @transform_0(%arg0: i32) -> i32 {
    %c0_i32 = arith.constant 0 : i32
    %c0_i32_0 = arith.constant 0 : i32
    return %c0_i32 : i32
  }
  func.func @transform_1(%arg0: i32) -> (i32, i32) {
    %c0_i32 = arith.constant 0 : i32
    %c0_i32_0 = arith.constant 0 : i32
    return %arg0, %c0_i32 : i32, i32
  }
  func.func @transform_2(%arg0: i32) -> (i32, i32) {
    %c0_i32 = arith.constant 0 : i32
    %c0_i32_0 = arith.constant 0 : i32
    return %arg0, %c0_i32 : i32, i32
  }
}

</mosaic_0001>

<llo_original>
// kernel: tpu_custom_call.1
$region0: #{tpu_custom_call.1}
  #allocation0 [shape = 'u32[]', space=smem, size = 0x4, offset = 0x4, fixed_abs, tag = 'smem constant byte address 0x4 - core index']
  #allocation1 [shape = 'u32[144,128]{1,0:T(1,128)}', space=vmem, size = 0x12000, scoped, tag = 'internal scratch']
  %s0 = inlined_call_operand.hbm [shape: f32[4], index: 0, kind: input, shape index: {}]
  %s1 = inlined_call_operand.hbm [shape: f32[2,1024], index: 1, kind: input, shape index: {}]
  %s2 = inlined_call_operand.hbm [shape: f32[2,1024], index: 2, kind: output, shape index: {}]
  %s3 = sld [smem:[#allocation0]]
  $region26: #{tpu_custom_call.1} parent=0
    _
  %s5 = ssub.s32 1, %s3
  %s6 = scalar_select 0, %s5, %s3
  $region1: #{tpu_custom_call.1} parent=0
    #allocation2 [shape = 'u8[512]{0}', space=smem, size = 0x200, scoped, tag = 'input window, operand 0, single buffered']
    #allocation3 [shape = 's32[1]{0}', space=sflag, size = 0x4, scoped, tag = 'scoped memory for tpu_custom_call.1']
    #allocation4 [shape = 's32[1]{0}', space=sflag, size = 0x4, scoped, tag = 'scoped memory for tpu_custom_call.1']
    #allocation5 [shape = 's32[1]{0}', space=sflag, size = 0x4, scoped, tag = 'scoped memory for tpu_custom_call.1']
    #allocation6 [shape = 'u8[8192]{0}', space=vmem, size = 0x2000, scoped, tag = 'input window, operand 1, single buffered']
    #allocation7 [shape = 'u8[8192]{0}', space=vmem, size = 0x2000, scoped, tag = 'output window, operand 0, single buffered']
    %7 = vsyncpa [#allocation5], 0
    %8 = vsyncpa [#allocation3], 0
    %9 = vsyncpa [#allocation4], 0
    // Predicated region
    $region2: #{tpu_custom_call.1} parent=1 // pred_check
      _
    $region3: #{tpu_custom_call.1} parent=1 // pred_check_branch
      %11 = sbr.rel (0) target = $region5
    $region4: #{tpu_custom_call.1} parent=1 // pred_region
      %s13 = ssub.s32 16, 16
      %14 = vsyncadd [#allocation5], %s13
      %17 = dma.hbm_to_smem %s0, 16, [#allocation2], [#allocation5]
    $region5: #{tpu_custom_call.1} parent=1 // pred_fallthru
      _
    // Predicated region
    $region6: #{tpu_custom_call.1} parent=1 // pred_check
      _
    $region7: #{tpu_custom_call.1} parent=1 // pred_check_branch
      %19 = sbr.rel (0) target = $region9
    $region8: #{tpu_custom_call.1} parent=1 // pred_region
      %s21 = ssub.s32 256, 256
      %22 = vsyncadd [#allocation3], %s21
      %s24 = sshll.u32 [#allocation6], 4
      %s25 = int_to_ptr.vmem [resolvable:$true] %s24
      %27 = dma.hbm_to_vmem [thread:$0]  %s1, 256, %s25, [#allocation3]
    $region9: #{tpu_custom_call.1} parent=1 // pred_fallthru
      _
    // Predicated region
    $region10: #{tpu_custom_call.1} parent=1 // pred_check
      _
    $region11: #{tpu_custom_call.1} parent=1 // pred_check_branch
      %29 = sbr.rel (0) target = $region13
    $region12: #{tpu_custom_call.1} parent=1 // pred_region
      %30 = dma.done [#allocation5], 16
    $region13: #{tpu_custom_call.1} parent=1 // pred_fallthru
      _
    // Predicated region
    $region14: #{tpu_custom_call.1} parent=1 // pred_check
      _
    $region15: #{tpu_custom_call.1} parent=1 // pred_check_branch
      %32 = sbr.rel (0) target = $region17
    $region16: #{tpu_custom_call.1} parent=1 // pred_region
      %33 = dma.done [#allocation3], 256
    $region17: #{tpu_custom_call.1} parent=1 // pred_fallthru
      _
    %34 = sfence
    %v35 = vld [vmem:[#allocation6] sm:$0xff]
    %v36 = vld [vmem:[#allocation6 + $0x8] sm:$0xff]
    %s37 = sld [smem:[#allocation2]]
    %s38 = sld [smem:[#allocation2 + $0x2]]
    %v39 = vstv %s38
    %v40 = vmul.f32 %v35, %v39
    %v41 = vmul.f32 %v36, %v39
    %v42 = vmul.f32 %v40, 1.442695
    %v43 = vpow.pop %v42
    %v44 = vmul.f32 %v41, 1.442695
    %v45 = vpow.pop %v44
    %v46 = vstv %s37
    %v47 = vmul.f32 %v46, %v43
    %v48 = vmul.f32 %v46, %v45
    %s49 = sld [smem:[#allocation2 + $0x1]]
    %s50 = sld [smem:[#allocation2 + $0x3]]
    %v51 = vstv %s50
    %v52 = vmul.f32 %v35, %v51
    %v53 = vmul.f32 %v36, %v51
    %v54 = vmul.f32 %v52, 1.442695
    %v55 = vpow.pop %v54
    %v56 = vmul.f32 %v53, 1.442695
    %v57 = vpow.pop %v56
    %v58 = vstv %s49
    %v59 = vmul.f32 %v58, %v55
    %v60 = vmul.f32 %v58, %v57
    %v61 = vadd.f32 %v47, %v59
    %v62 = vadd.f32 %v48, %v60
    %63 = vst [vmem:[#allocation7] sm:$0xff] %v61
    %64 = vst [vmem:[#allocation7 + $0x8] sm:$0xff] %v62
    // Predicated region
    $region18: #{tpu_custom_call.1} parent=1 // pred_check
      _
    $region19: #{tpu_custom_call.1} parent=1 // pred_check_branch
      %66 = sbr.rel (0) target = $region21
    $region20: #{tpu_custom_call.1} parent=1 // pred_region
      %s68 = ssub.s32 256, 256
      %69 = vsyncadd [#allocation4], %s68
      %s71 = sshll.u32 [#allocation7], 4
      %s72 = int_to_ptr.vmem [resolvable:$true] %s71
      %74 = dma.vmem_to_hbm [thread:$0]  %s72, 256, %s2, [#allocation4]
    $region21: #{tpu_custom_call.1} parent=1 // pred_fallthru
      _
    // Predicated region
    $region22: #{tpu_custom_call.1} parent=1 // pred_check
      _
    $region23: #{tpu_custom_call.1} parent=1 // pred_check_branch
      %76 = sbr.rel (0) target = $region25
    $region24: #{tpu_custom_call.1} parent=1 // pred_region
      %77 = dma.done [#allocation4], 256
    $region25: #{tpu_custom_call.1} parent=1 // pred_fallthru
      _
    %78 = vsyncpa [#allocation3], 1
    %79 = vsyncpa [#allocation4], 1
    %80 = vsyncpa [#allocation5], 1

</llo_original>
